<compile_context>
chip_gen: v7x
topology: tpu7x:2x2x1
jax: 0.10.0
libtpu: 0.0.40
codegen_flags: <defaults>
</compile_context>

<pallas_src>
import functools
import math

import jax
import jax.numpy as jnp
from jax.experimental import pallas as pl
from jax.experimental.pallas import tpu as pltpu


def _round_up(a, m):
    return ((a + m - 1) // m) * m


def _num_tensorcores():
    """Best-effort TensorCore-per-chip count (1 if unknown)."""
    try:
        info = pltpu.get_tpu_info()
        for attr in ("num_cores", "tensorcores_per_chip", "num_tensorcores",
                     "cores_per_chip", "core_count"):
            v = getattr(info, attr, None)
            if isinstance(v, int) and v > 0:
                return v
    except Exception:
        pass
    return 1


def _a_kernel(n_layers, x_ref, *rest):
    """rest = (wbd_0, bflat_0, wbd_1, bflat_1, ..., o_ref).

    All layer weights are 2-D block-diagonal (bf16), so the whole forward is
    n_layers lane-dense MXU matmuls on the flat [TN, D*f] activation with f32
    accumulation.
    """
    o_ref = rest[-1]
    layer_refs = rest[:-1]

    h = x_ref[...]                                    # (TN, D*f_in0) f32
    for li in range(n_layers):
        w = layer_refs[2 * li][...]                   # (D*f_in, D*f_out) bf16
        b = layer_refs[2 * li + 1][...]               # (1,     D*f_out) f32
        # sigmoid = 1 / (1 + exp(-h)): exp + approx reciprocal both on EUP.
        s = pl.reciprocal(1.0 + jnp.exp(-h), approx=True)
        h = jnp.dot(s.astype(jnp.bfloat16), w,
                    preferred_element_type=jnp.float32) + b
    o_ref[...] = h                                    # f32 store


def prepare_block_diag_params(layer_params, *, weight_dtype=jnp.bfloat16):
    """Build, once, the per-layer 2-D block-diagonal weights (weight_dtype) and
    flat f32 biases operating on flattened [N, D*f] activations.

    Vectorized (single einsum against an identity per layer) -- no Python loop
    of D scatter ops at trace time.  Call this once and reuse across calls.
    """
    prepared = []
    for (w, b) in layer_params:
        d, f_in, f_out = w.shape
        eye = jnp.eye(d, dtype=jnp.float32)
        # wbd[j*f_in + i, e*f_out + o] = w[j, i, o] * (j == e)
        wbd = jnp.einsum("jio,je->jieo", w.astype(jnp.float32), eye)
        wbd = wbd.reshape(d * f_in, d * f_out).astype(weight_dtype)
        bflat = b.astype(jnp.float32).reshape(1, d * f_out)
        prepared.append((wbd, bflat))
    return prepared


def a_forward(x, prepared_params, *, tn_max=1024):
    """Pallas forward of module A.

    x: (N, D, f_in0) float32.
    prepared_params: output of prepare_block_diag_params().
    """
    n, d, f0 = x.shape
    n_layers = len(prepared_params)
    out_cols = prepared_params[-1][0].shape[1]        # D * f_last
    f_last = out_cols // d
    assert prepared_params[0][0].shape[0] == d * f0

    flat_params = []
    for (w, b) in prepared_params:
        flat_params += [w, b]

    x_flat = x.reshape(n, d * f0).astype(jnp.float32)

    # ---- row tiling -------------------------------------------------------
    tn_max = max(8, (tn_max // 8) * 8)
    if n <= tn_max:
        tn = n                      # block dim == full array dim: always legal
    else:
        tn = tn_max                 # multiple of 8
    # On multi-TensorCore chips keep >= 2 grid steps so the "parallel" axis
    # can be sharded; on single-TC chips (v5e/v6e) don't split for nothing.
    if _num_tensorcores() >= 2 and pl.cdiv(n, tn) < 2 and tn >= 16:
        tn = _round_up(pl.cdiv(tn, 2), 8)
    grid = (pl.cdiv(n, tn),)

    # ---- VMEM budget ------------------------------------------------------
    act_bytes = 2 * tn * (d * f0 + out_cols) * 4              # double-buffered tiles
    w_bytes = sum(int(p.size) * p.dtype.itemsize for p in flat_params)
    est = act_bytes + 2 * w_bytes                              # worst case: weights x2
    vmem_limit = int(min(max(2 * est + (8 << 20), 32 << 20), 64 << 20))

    kernel = functools.partial(_a_kernel, n_layers)

    def _build_and_call(single_buffer_weights):
        in_specs = [pl.BlockSpec((tn, d * f0), lambda i: (i, 0))]   # row tile of x
        for p in flat_params:                                       # resident weights
            kwargs = {}
            if single_buffer_weights:
                # Grid-invariant blocks: one VMEM copy is enough.
                kwargs["pipeline_mode"] = pl.Buffered(1)
            in_specs.append(pl.BlockSpec(p.shape, lambda i: (0, 0), **kwargs))
        return pl.pallas_call(
            kernel,
            out_shape=jax.ShapeDtypeStruct((n, out_cols), jnp.float32),
            grid=grid,
            in_specs=in_specs,
            out_specs=pl.BlockSpec((tn, out_cols), lambda i: (i, 0)),
            compiler_params=pltpu.CompilerParams(
                dimension_semantics=("parallel",),
                vmem_limit_bytes=vmem_limit),
        )(x_flat, *flat_params)

    try:
        out_flat = _build_and_call(True)
    except Exception:
        # pipeline_mode=pl.Buffered(1) unsupported on this jax/backend;
        # default double-buffering is functionally identical.
        out_flat = _build_and_call(False)

    return out_flat.reshape(n, d, f_last)


def a_ref(x, layer_params):
    """Pure-JAX f32 reference mirroring the PyTorch A.forward."""
    h = x
    for (w, b) in layer_params:
        h = jnp.einsum("ndk,dko->ndo", jax.nn.sigmoid(h), w) + b[None]
    return h


def init_params(key, dims):
    """Deterministic init matching L.reset_parameters shapes/bounds."""
    d = dims[0]
    n_layers = len(dims) - 2
    keys = jax.random.split(key, 2 * n_layers)
    params = []
    for i in range(n_layers):
        f_in, f_out = dims[i + 1], dims[i + 2]
        bound = 1.0 / math.sqrt(f_in)
        w = jax.random.uniform(keys[2 * i], (d, f_in, f_out),
                               jnp.float32, -bound, bound)
        b = jax.random.uniform(keys[2 * i + 1], (d, f_out),
                               jnp.float32, -bound, bound)
        params.append((w, b))
    return params


if __name__ == "__main__":
    dims = (8, 16, 8, 1)      # D=8 variables; per-variable MLP 16 -> 8 -> 1
    N = 20                    # batch; not a multiple of 8 on purpose
    key = jax.random.PRNGKey(0)
    k_x, k_p = jax.random.split(key)

    x = jax.random.normal(k_x, (N, dims[0], dims[1]), jnp.float32)
    layer_params = init_params(k_p, dims)
    prepared = prepare_block_diag_params(layer_params)   # built once, reused

    ref = a_ref(x, layer_params)

    # Default path: one large full-batch row tile.
    out = jax.block_until_ready(a_forward(x, prepared))
    assert out.shape == (N, dims[0], dims[-1])
    # bf16 matmul operands + approx reciprocal -> loosened tolerance vs f32 ref.
    assert jnp.allclose(out, ref, rtol=3e-2, atol=3e-2), "mismatch (default tiles)"

    # Small-tile path: exercises multi-step grid + partial (overhanging) last tile.
    out_tiled = jax.block_until_ready(a_forward(x, prepared, tn_max=8))
    assert out_tiled.shape == (N, dims[0], dims[-1])
    assert jnp.allclose(out_tiled, ref, rtol=3e-2, atol=3e-2), "mismatch (tiled)"

    print("KERNEL_OK")
</pallas_src>

<mosaic_0001>
module attributes {stable_mosaic.version = 11 : i64} {
  func.func @_a_kernel(%arg0: i32, %arg1: memref<20x128xf32, #tpu.memory_space<vmem>>, %arg2: memref<128x64xbf16, #tpu.memory_space<vmem>>, %arg3: memref<1x64xf32, #tpu.memory_space<vmem>>, %arg4: memref<64x8xbf16, #tpu.memory_space<vmem>>, %arg5: memref<1x8xf32, #tpu.memory_space<vmem>>, %arg6: memref<20x8xf32, #tpu.memory_space<vmem>>) attributes {dimension_semantics = [#tpu.dimension_semantics<parallel>], iteration_bounds = array<i64: 1>, scalar_prefetch = 0 : i64, scratch_operands = 0 : i64, tpu.core_type = #tpu.core_type<tc>, window_params = [{transform_indices = @transform_0, window_bounds = array<i64: 20, 128>}, {pipeline_mode = #tpu.pipeline_mode<synchronous>, transform_indices = @transform_1, window_bounds = array<i64: 128, 64>}, {pipeline_mode = #tpu.pipeline_mode<synchronous>, transform_indices = @transform_2, window_bounds = array<i64: 1, 64>}, {pipeline_mode = #tpu.pipeline_mode<synchronous>, transform_indices = @transform_3, window_bounds = array<i64: 64, 8>}, {pipeline_mode = #tpu.pipeline_mode<synchronous>, transform_indices = @transform_4, window_bounds = array<i64: 1, 8>}, {transform_indices = @transform_5, window_bounds = array<i64: 20, 8>}]} {
    %c0 = arith.constant 0 : index
    %c0_0 = arith.constant 0 : index
    %0 = vector.load %arg1[%c0, %c0_0] : memref<20x128xf32, #tpu.memory_space<vmem>>, vector<20x128xf32>
    %c0_1 = arith.constant 0 : index
    %c0_2 = arith.constant 0 : index
    %1 = vector.load %arg2[%c0_1, %c0_2] : memref<128x64xbf16, #tpu.memory_space<vmem>>, vector<128x64xbf16>
    %c0_3 = arith.constant 0 : index
    %c0_4 = arith.constant 0 : index
    %2 = vector.load %arg3[%c0_3, %c0_4] : memref<1x64xf32, #tpu.memory_space<vmem>>, vector<1x64xf32>
    %cst = arith.constant 0.000000e+00 : f32
    %3 = vector.broadcast %cst : f32 to vector<20x128xf32>
    %4 = arith.subf %3, %0 : vector<20x128xf32>
    %5 = math.exp %4 : vector<20x128xf32>
    %cst_5 = arith.constant 1.000000e+00 : f32
    %6 = vector.broadcast %cst_5 : f32 to vector<20x128xf32>
    %7 = arith.addf %6, %5 : vector<20x128xf32>
    %8 = tpu.reciprocal %7 {approx = true} : vector<20x128xf32> -> vector<20x128xf32>
    %9 = arith.truncf %8 : vector<20x128xf32> to vector<20x128xbf16>
    %cst_6 = arith.constant dense<0.000000e+00> : vector<20x64xf32>
    %10 = tpu.matmul %9, %1, %cst_6 {dimension_numbers = #tpu.dot_dimension_numbers<[1], [0], [0], [1], [0, 0, 1, 1], [], []>} : vector<20x128xbf16>, vector<128x64xbf16>, vector<20x64xf32> -> vector<20x64xf32>
    %11 = vector.broadcast %2 : vector<1x64xf32> to vector<20x64xf32>
    %12 = arith.addf %10, %11 : vector<20x64xf32>
    %c0_7 = arith.constant 0 : index
    %c0_8 = arith.constant 0 : index
    %13 = vector.load %arg4[%c0_7, %c0_8] : memref<64x8xbf16, #tpu.memory_space<vmem>>, vector<64x8xbf16>
    %c0_9 = arith.constant 0 : index
    %c0_10 = arith.constant 0 : index
    %14 = vector.load %arg5[%c0_9, %c0_10] : memref<1x8xf32, #tpu.memory_space<vmem>>, vector<1x8xf32>
    %cst_11 = arith.constant 0.000000e+00 : f32
    %15 = vector.broadcast %cst_11 : f32 to vector<20x64xf32>
    %16 = arith.subf %15, %12 : vector<20x64xf32>
    %17 = math.exp %16 : vector<20x64xf32>
    %cst_12 = arith.constant 1.000000e+00 : f32
    %18 = vector.broadcast %cst_12 : f32 to vector<20x64xf32>
    %19 = arith.addf %18, %17 : vector<20x64xf32>
    %20 = tpu.reciprocal %19 {approx = true} : vector<20x64xf32> -> vector<20x64xf32>
    %21 = arith.truncf %20 : vector<20x64xf32> to vector<20x64xbf16>
    %cst_13 = arith.constant dense<0.000000e+00> : vector<20x8xf32>
    %22 = tpu.matmul %21, %13, %cst_13 {dimension_numbers = #tpu.dot_dimension_numbers<[1], [0], [0], [1], [0, 0, 1, 1], [], []>} : vector<20x64xbf16>, vector<64x8xbf16>, vector<20x8xf32> -> vector<20x8xf32>
    %23 = vector.broadcast %14 : vector<1x8xf32> to vector<20x8xf32>
    %24 = arith.addf %22, %23 : vector<20x8xf32>
    %c0_14 = arith.constant 0 : index
    %c0_15 = arith.constant 0 : index
    %25 = vector.load %arg6[%c0_14, %c0_15] : memref<20x8xf32, #tpu.memory_space<vmem>>, vector<20x8xf32>
    tpu.vector_store %arg6[%c0_14, %c0_15], %24 {strides = array<i32>} : memref<20x8xf32, #tpu.memory_space<vmem>>, vector<20x8xf32>,
    return
  }
  func.func @transform_0(%arg0: i32) -> (i32, i32) {
    %c0_i32 = arith.constant 0 : i32
    %c0_i32_0 = arith.constant 0 : i32
    return %arg0, %c0_i32 : i32, i32
  }
  func.func @transform_1(%arg0: i32) -> (i32, i32) {
    %c0_i32 = arith.constant 0 : i32
    %c0_i32_0 = arith.constant 0 : i32
    %c0_i32_1 = arith.constant 0 : i32
    return %c0_i32, %c0_i32_0 : i32, i32
  }
  func.func @transform_2(%arg0: i32) -> (i32, i32) {
    %c0_i32 = arith.constant 0 : i32
    %c0_i32_0 = arith.constant 0 : i32
    %c0_i32_1 = arith.constant 0 : i32
    return %c0_i32, %c0_i32_0 : i32, i32
  }
  func.func @transform_3(%arg0: i32) -> (i32, i32) {
    %c0_i32 = arith.constant 0 : i32
    %c0_i32_0 = arith.constant 0 : i32
    %c0_i32_1 = arith.constant 0 : i32
    return %c0_i32, %c0_i32_0 : i32, i32
  }
  func.func @transform_4(%arg0: i32) -> (i32, i32) {
    %c0_i32 = arith.constant 0 : i32
    %c0_i32_0 = arith.constant 0 : i32
    %c0_i32_1 = arith.constant 0 : i32
    return %c0_i32, %c0_i32_0 : i32, i32
  }
  func.func @transform_5(%arg0: i32) -> (i32, i32) {
    %c0_i32 = arith.constant 0 : i32
    %c0_i32_0 = arith.constant 0 : i32
    return %arg0, %c0_i32 : i32, i32
  }
}

module attributes {stable_mosaic.version = 11 : i64} {
  func.func @_a_kernel(%arg0: i32, %arg1: memref<20x128xf32, #tpu.memory_space<vmem>>, %arg2: memref<128x64xbf16, #tpu.memory_space<vmem>>, %arg3: memref<1x64xf32, #tpu.memory_space<vmem>>, %arg4: memref<64x8xbf16, #tpu.memory_space<vmem>>, %arg5: memref<1x8xf32, #tpu.memory_space<vmem>>, %arg6: memref<20x8xf32, #tpu.memory_space<vmem>>) attributes {dimension_semantics = [#tpu.dimension_semantics<parallel>], iteration_bounds = array<i64: 1>, scalar_prefetch = 0 : i64, scratch_operands = 0 : i64, tpu.core_type = #tpu.core_type<tc>, window_params = [{transform_indices = @transform_0, window_bounds = array<i64: 20, 128>}, {pipeline_mode = #tpu.pipeline_mode<synchronous>, transform_indices = @transform_1, window_bounds = array<i64: 128, 64>}, {pipeline_mode = #tpu.pipeline_mode<synchronous>, transform_indices = @transform_2, window_bounds = array<i64: 1, 64>}, {pipeline_mode = #tpu.pipeline_mode<synchronous>, transform_indices = @transform_3, window_bounds = array<i64: 64, 8>}, {pipeline_mode = #tpu.pipeline_mode<synchronous>, transform_indices = @transform_4, window_bounds = array<i64: 1, 8>}, {transform_indices = @transform_5, window_bounds = array<i64: 20, 8>}]} {
    %c0 = arith.constant 0 : index
    %c0_0 = arith.constant 0 : index
    %0 = vector.load %arg1[%c0, %c0_0] : memref<20x128xf32, #tpu.memory_space<vmem>>, vector<20x128xf32>
    %c0_1 = arith.constant 0 : index
    %c0_2 = arith.constant 0 : index
    %1 = vector.load %arg2[%c0_1, %c0_2] : memref<128x64xbf16, #tpu.memory_space<vmem>>, vector<128x64xbf16>
    %c0_3 = arith.constant 0 : index
    %c0_4 = arith.constant 0 : index
    %2 = vector.load %arg3[%c0_3, %c0_4] : memref<1x64xf32, #tpu.memory_space<vmem>>, vector<1x64xf32>
    %cst = arith.constant 0.000000e+00 : f32
    %3 = vector.broadcast %cst : f32 to vector<20x128xf32>
    %4 = arith.subf %3, %0 : vector<20x128xf32>
    %5 = math.exp %4 : vector<20x128xf32>
    %cst_5 = arith.constant 1.000000e+00 : f32
    %6 = vector.broadcast %cst_5 : f32 to vector<20x128xf32>
    %7 = arith.addf %6, %5 : vector<20x128xf32>
    %8 = tpu.reciprocal %7 {approx = true} : vector<20x128xf32> -> vector<20x128xf32>
    %9 = arith.truncf %8 : vector<20x128xf32> to vector<20x128xbf16>
    %cst_6 = arith.constant dense<0.000000e+00> : vector<20x64xf32>
    %10 = tpu.matmul %9, %1, %cst_6 {dimension_numbers = #tpu.dot_dimension_numbers<[1], [0], [0], [1], [0, 0, 1, 1], [], []>} : vector<20x128xbf16>, vector<128x64xbf16>, vector<20x64xf32> -> vector<20x64xf32>
    %11 = vector.broadcast %2 : vector<1x64xf32> to vector<20x64xf32>
    %12 = arith.addf %10, %11 : vector<20x64xf32>
    %c0_7 = arith.constant 0 : index
    %c0_8 = arith.constant 0 : index
    %13 = vector.load %arg4[%c0_7, %c0_8] : memref<64x8xbf16, #tpu.memory_space<vmem>>, vector<64x8xbf16>
    %c0_9 = arith.constant 0 : index
    %c0_10 = arith.constant 0 : index
    %14 = vector.load %arg5[%c0_9, %c0_10] : memref<1x8xf32, #tpu.memory_space<vmem>>, vector<1x8xf32>
    %cst_11 = arith.constant 0.000000e+00 : f32
    %15 = vector.broadcast %cst_11 : f32 to vector<20x64xf32>
    %16 = arith.subf %15, %12 : vector<20x64xf32>
    %17 = math.exp %16 : vector<20x64xf32>
    %cst_12 = arith.constant 1.000000e+00 : f32
    %18 = vector.broadcast %cst_12 : f32 to vector<20x64xf32>
    %19 = arith.addf %18, %17 : vector<20x64xf32>
    %20 = tpu.reciprocal %19 {approx = true} : vector<20x64xf32> -> vector<20x64xf32>
    %21 = arith.truncf %20 : vector<20x64xf32> to vector<20x64xbf16>
    %cst_13 = arith.constant dense<0.000000e+00> : vector<20x8xf32>
    %22 = tpu.matmul %21, %13, %cst_13 {dimension_numbers = #tpu.dot_dimension_numbers<[1], [0], [0], [1], [0, 0, 1, 1], [], []>} : vector<20x64xbf16>, vector<64x8xbf16>, vector<20x8xf32> -> vector<20x8xf32>
    %23 = vector.broadcast %14 : vector<1x8xf32> to vector<20x8xf32>
    %24 = arith.addf %22, %23 : vector<20x8xf32>
    %c0_14 = arith.constant 0 : index
    %c0_15 = arith.constant 0 : index
    %25 = vector.load %arg6[%c0_14, %c0_15] : memref<20x8xf32, #tpu.memory_space<vmem>>, vector<20x8xf32>
    tpu.vector_store %arg6[%c0_14, %c0_15], %24 {strides = array<i32>} : memref<20x8xf32, #tpu.memory_space<vmem>>, vector<20x8xf32>,
    return
  }
  func.func @transform_0(%arg0: i32) -> (i32, i32) {
    %c0_i32 = arith.constant 0 : i32
    %c0_i32_0 = arith.constant 0 : i32
    return %arg0, %c0_i32 : i32, i32
  }
  func.func @transform_1(%arg0: i32) -> (i32, i32) {
    %c0_i32 = arith.constant 0 : i32
    %c0_i32_0 = arith.constant 0 : i32
    %c0_i32_1 = arith.constant 0 : i32
    return %c0_i32, %c0_i32_0 : i32, i32
  }
  func.func @transform_2(%arg0: i32) -> (i32, i32) {
    %c0_i32 = arith.constant 0 : i32
    %c0_i32_0 = arith.constant 0 : i32
    %c0_i32_1 = arith.constant 0 : i32
    return %c0_i32, %c0_i32_0 : i32, i32
  }
  func.func @transform_3(%arg0: i32) -> (i32, i32) {
    %c0_i32 = arith.constant 0 : i32
    %c0_i32_0 = arith.constant 0 : i32
    %c0_i32_1 = arith.constant 0 : i32
    return %c0_i32, %c0_i32_0 : i32, i32
  }
  func.func @transform_4(%arg0: i32) -> (i32, i32) {
    %c0_i32 = arith.constant 0 : i32
    %c0_i32_0 = arith.constant 0 : i32
    %c0_i32_1 = arith.constant 0 : i32
    return %c0_i32, %c0_i32_0 : i32, i32
  }
  func.func @transform_5(%arg0: i32) -> (i32, i32) {
    %c0_i32 = arith.constant 0 : i32
    %c0_i32_0 = arith.constant 0 : i32
    return %arg0, %c0_i32 : i32, i32
  }
}

</mosaic_0001>

<llo_original>
// kernel: tpu_custom_call.1
$region0: #{tpu_custom_call.1}
  #allocation0 [shape = 'u32[]', space=smem, size = 0x4, offset = 0x4, fixed_abs, tag = 'smem constant byte address 0x4 - core index']
  #allocation1 [shape = 'u32[144,128]{1,0:T(1,128)}', space=vmem, size = 0x12000, scoped, tag = 'internal scratch']
  %s0 = inlined_call_operand.vmem [shape: f32[20,128], index: 0, kind: input, shape index: {}]
  %s1 = inlined_call_operand.vmem [shape: bf16[128,64], index: 1, kind: input, shape index: {}]
  %s2 = inlined_call_operand.vmem [shape: f32[1,64], index: 2, kind: input, shape index: {}]
  %s3 = inlined_call_operand.vmem [shape: bf16[64,8], index: 3, kind: input, shape index: {}]
  %s4 = inlined_call_operand.vmem [shape: f32[1,8], index: 4, kind: input, shape index: {}]
  %s5 = inlined_call_operand.vmem [shape: f32[20,8], index: 5, kind: output, shape index: {}]
  %s6 = sld [smem:[#allocation0]]
  $region30: #{tpu_custom_call.1} parent=0
    _
  %s8 = ssub.s32 1, %s6
  %s9 = scalar_select 0, %s8, %s6
  // Predicated region
  $region2: #{tpu_custom_call.1} parent=0 // pred_check
    _
  $region3: #{tpu_custom_call.1} parent=0 // pred_check_branch
    %11 = sbr.rel (0) target = $region5
  $region4: #{tpu_custom_call.1} parent=0 // pred_region
    _
  $region5: #{tpu_custom_call.1} parent=0 // pred_fallthru
    _
  // Predicated region
  $region6: #{tpu_custom_call.1} parent=0 // pred_check
    _
  $region7: #{tpu_custom_call.1} parent=0 // pred_check_branch
    %13 = sbr.rel (0) target = $region9
  $region8: #{tpu_custom_call.1} parent=0 // pred_region
    _
  $region9: #{tpu_custom_call.1} parent=0 // pred_fallthru
    _
  // Predicated region
  $region10: #{tpu_custom_call.1} parent=0 // pred_check
    _
  $region11: #{tpu_custom_call.1} parent=0 // pred_check_branch
    %15 = sbr.rel (0) target = $region13
  $region12: #{tpu_custom_call.1} parent=0 // pred_region
    _
  $region13: #{tpu_custom_call.1} parent=0 // pred_fallthru
    _
  // Predicated region
  $region14: #{tpu_custom_call.1} parent=0 // pred_check
    _
  $region15: #{tpu_custom_call.1} parent=0 // pred_check_branch
    %17 = sbr.rel (0) target = $region17
  $region16: #{tpu_custom_call.1} parent=0 // pred_region
    _
  $region17: #{tpu_custom_call.1} parent=0 // pred_fallthru
    _
  // Predicated region
  $region18: #{tpu_custom_call.1} parent=0 // pred_check
    _
  $region19: #{tpu_custom_call.1} parent=0 // pred_check_branch
    %19 = sbr.rel (0) target = $region21
  $region20: #{tpu_custom_call.1} parent=0 // pred_region
    _
  $region21: #{tpu_custom_call.1} parent=0 // pred_fallthru
    _
  %v21 = vld [vmem:[%s0] sm:$0xff]
  %v22 = vld [vmem:[%s0 + $0x8] sm:$0xff]
  %v23 = vld [vmem:[%s0 + $0x10] sm:$0xf]
  %v24 = vld [vmem:[%s1] sm:$0xf]
  %v25 = vld [vmem:[%s1 + $0x4] sm:$0xf]
  %v26 = vld [vmem:[%s1 + $0x8] sm:$0xf]
  %v27 = vld [vmem:[%s1 + $0xc] sm:$0xf]
  %v28 = vld [vmem:[%s1 + $0x10] sm:$0xf]
  %v29 = vld [vmem:[%s1 + $0x14] sm:$0xf]
  %v30 = vld [vmem:[%s1 + $0x18] sm:$0xf]
  %v31 = vld [vmem:[%s1 + $0x1c] sm:$0xf]
  %v32 = vld [vmem:[%s1 + $0x20] sm:$0xf]
  %v33 = vld [vmem:[%s1 + $0x24] sm:$0xf]
  %v34 = vld [vmem:[%s1 + $0x28] sm:$0xf]
  %v35 = vld [vmem:[%s1 + $0x2c] sm:$0xf]
  %v36 = vld [vmem:[%s1 + $0x30] sm:$0xf]
  %v37 = vld [vmem:[%s1 + $0x34] sm:$0xf]
  %v38 = vld [vmem:[%s1 + $0x38] sm:$0xf]
  %v39 = vld [vmem:[%s1 + $0x3c] sm:$0xf]
  %v40 = vld [vmem:[%s2] sm:$0x1]
  %v41 = vsub.f32 0.0, %v21
  %v42 = vsub.f32 0.0, %v22
  %v43 = vsub.f32 0.0, %v23
  %v44 = vmul.f32 %v41, 1.442695
  %v45 = vpow.pop %v44
  %v46 = vmul.f32 %v42, 1.442695
  %v47 = vpow.pop %v46
  %v48 = vmul.f32 %v43, 1.442695
  %v49 = vpow.pop %v48
  %v50 = vadd.f32 %v45, 1.0
  %v51 = vadd.f32 %v47, 1.0
  %v52 = vadd.f32 %v49, 1.0
  %v53 = vrcp.pop %v50
  %v54 = vrcp.pop %v51
  %v55 = vrcp.pop %v52
  %v56 = vpack.c.bf16 %v54, %v53
  %v57 = vpack.c.bf16 %v55, %v55
  %v59 = vlaneseq
  %v60 = vshrl.u32 %v59, 7
  %v61 = vsub.s32 0, %v60
  %v62 = vrot.slane %v40, %v61
  %v80 = vunpack.c.l.b16 %v24
  %v81 = vunpack.c.l.b16 %v25
  %v82 = vunpack.c.l.b16 %v26
  %v83 = vunpack.c.l.b16 %v27
  %v84 = vunpack.c.l.b16 %v28
  %v85 = vunpack.c.l.b16 %v29
  %v86 = vunpack.c.l.b16 %v30
  %v87 = vunpack.c.l.b16 %v31
  %v88 = vunpack.c.l.b16 %v32
  %v89 = vunpack.c.l.b16 %v33
  %v90 = vunpack.c.l.b16 %v34
  %v91 = vunpack.c.l.b16 %v35
  %v92 = vunpack.c.l.b16 %v36
  %v93 = vunpack.c.l.b16 %v37
  %v94 = vunpack.c.l.b16 %v38
  %v95 = vunpack.c.l.b16 %v39
  %v96 = vpack.c.b16 %v81, %v80
  %v97 = vpack.c.b16 %v83, %v82
  %v98 = vpack.c.b16 %v85, %v84
  %v99 = vpack.c.b16 %v87, %v86
  %v100 = vpack.c.b16 %v89, %v88
  %v101 = vpack.c.b16 %v91, %v90
  %v102 = vpack.c.b16 %v93, %v92
  %v103 = vpack.c.b16 %v95, %v94
  %112 = vmatprep.subr.bf16.mxu0 0
  %113 = vmatpush1.bf16.msra.mxu0 %v96
  %114 = vmatprep.subr.bf16.mxu0 0
  %115 = vmatpush1.bf16.msra.mxu0 %v97
  %116 = vmatprep.subr.bf16.mxu0 0
  %117 = vmatpush1.bf16.msra.mxu0 %v98
  %118 = vmatprep.subr.bf16.mxu0 0
  %119 = vmatpush1.bf16.msra.mxu0 %v99
  %120 = vmatprep.subr.bf16.mxu0 0
  %121 = vmatpush1.bf16.msra.mxu0 %v100
  %122 = vmatprep.subr.bf16.mxu0 0
  %123 = vmatpush1.bf16.msra.mxu0 %v101
  %124 = vmatprep.subr.bf16.mxu0 0
  %125 = vmatpush1.bf16.msra.mxu0 %v102
  %126 = vmatprep.subr.bf16.mxu0 0
  %127 = vmatpush1.bf16.msra.mxu0 %v103
  %128 = vmatprep.subr.bf16.mxu0 0
  %129 = vmatpush1.bf16.msra.mxu0 0
  %130 = vmatprep.subr.bf16.mxu0 0
  %131 = vmatpush1.bf16.msra.mxu0 0
  %132 = vmatprep.subr.bf16.mxu0 0
  %133 = vmatpush1.bf16.msra.mxu0 0
  %134 = vmatprep.subr.bf16.mxu0 0
  %135 = vmatpush1.bf16.msra.mxu0 0
  %136 = vmatprep.subr.bf16.mxu0 0
  %137 = vmatpush1.bf16.msra.mxu0 0
  %138 = vmatprep.subr.bf16.mxu0 0
  %139 = vmatpush1.bf16.msra.mxu0 0
  %140 = vmatprep.subr.bf16.mxu0 0
  %141 = vmatpush1.bf16.msra.mxu0 0
  %142 = vmatprep.subr.bf16.mxu0 0
  %143 = vmatpush1.bf16.msra.mxu0 0
  %144 = vmatprep.mubr.bf16.mxu0 0
  %145 = vmatmul.mubr.bf16.gmra.mrb[0].mxu0 %v56
  %v146 = vpop.f32.mrb[0].mxu0
  %v147 = vadd.f32 %v62, %v146
  %v148 = vpop.f32.mrb[0].mxu0
  %v149 = vpop.f32.mrb[0].mxu0
  %v150 = vadd.f32 %v62, %v149
  %v151 = vpop.f32.mrb[0].mxu0
  %152 = vmatprep.mubr.bf16.mxu0 0
  %153 = vmatmul.mubr.bf16.gmra.mrb[0].mxu0 %v57
  %v154 = vpop.f32.mrb[0].mxu0
  %v155 = vadd.f32 %v62, %v154
  %v156 = vpop.f32.mrb[0].mxu0
  %v157 = vpop.f32.mrb[0].mxu0
  %v158 = vpop.f32.mrb[0].mxu0
  %159 = vdwg.mxu0
  %v160 = vld [vmem:[%s3] sm:$0xf]
  %v161 = vld [vmem:[%s3 + $0x4] sm:$0xf]
  %v162 = vld [vmem:[%s3 + $0x8] sm:$0xf]
  %v163 = vld [vmem:[%s3 + $0xc] sm:$0xf]
  %v164 = vld [vmem:[%s3 + $0x10] sm:$0xf]
  %v165 = vld [vmem:[%s3 + $0x14] sm:$0xf]
  %v166 = vld [vmem:[%s3 + $0x18] sm:$0xf]
  %v167 = vld [vmem:[%s3 + $0x1c] sm:$0xf]
  %v168 = vld [vmem:[%s4] sm:$0x1]
  %v169 = vsub.f32 0.0, %v147
  %v170 = vsub.f32 0.0, %v150
  %v171 = vsub.f32 0.0, %v155
  %v172 = vmul.f32 %v169, 1.442695
  %v173 = vpow.pop %v172
  %v174 = vmul.f32 %v170, 1.442695
  %v175 = vpow.pop %v174
  %v176 = vmul.f32 %v171, 1.442695
  %v177 = vpow.pop %v176
  %v178 = vadd.f32 %v173, 1.0
  %v179 = vadd.f32 %v175, 1.0
  %v180 = vadd.f32 %v177, 1.0
  %v181 = vrcp.pop %v178
  %v182 = vrcp.pop %v179
  %v183 = vrcp.pop %v180
  %v184 = vpack.c.bf16 %v182, %v181
  %v185 = vpack.c.bf16 %v183, %v183
  %v187 = vlaneseq
  %v188 = vshrl.u32 %v187, 7
  %v189 = vsub.s32 0, %v188
  %v190 = vrot.slane %v168, %v189
  %v200 = vunpack.c.l.b16 %v160
  %v201 = vunpack.c.l.b16 %v161
  %v202 = vunpack.c.l.b16 %v162
  %v203 = vunpack.c.l.b16 %v163
  %v204 = vunpack.c.l.b16 %v164
  %v205 = vunpack.c.l.b16 %v165
  %v206 = vunpack.c.l.b16 %v166
  %v207 = vunpack.c.l.b16 %v167
  %v208 = vpack.c.b16 %v201, %v200
  %v209 = vpack.c.b16 %v203, %v202
  %v210 = vpack.c.b16 %v205, %v204
  %v211 = vpack.c.b16 %v207, %v206
  %vm216 = vcmask 523264
  %v218 = vsel %vm216, %v184, 0
  %v221 = vsel %vm216, %v185, 0
  %223 = vmatprep.subr.bf16.mxu0 0
  %224 = vmatpush1.bf16.msra.mxu0 %v208
  %225 = vmatprep.subr.bf16.mxu0 0
  %226 = vmatpush1.bf16.msra.mxu0 %v209
  %227 = vmatprep.subr.bf16.mxu0 0
  %228 = vmatpush1.bf16.msra.mxu0 %v210
  %229 = vmatprep.subr.bf16.mxu0 0
  %230 = vmatpush1.bf16.msra.mxu0 %v211
  %231 = vmatprep.subr.bf16.mxu0 0
  %232 = vmatpush1.bf16.msra.mxu0 0
  %233 = vmatprep.subr.bf16.mxu0 0
  %234 = vmatpush1.bf16.msra.mxu0 0
  %235 = vmatprep.subr.bf16.mxu0 0
  %236 = vmatpush1.bf16.msra.mxu0 0
  %237 = vmatprep.subr.bf16.mxu0 0
  %238 = vmatpush1.bf16.msra.mxu0 0
  %239 = vmatprep.subr.bf16.mxu0 0
  %240 = vmatpush1.bf16.msra.mxu0 0
  %241 = vmatprep.subr.bf16.mxu0 0
  %242 = vmatpush1.bf16.msra.mxu0 0
  %243 = vmatprep.subr.bf16.mxu0 0
  %244 = vmatpush1.bf16.msra.mxu0 0
  %245 = vmatprep.subr.bf16.mxu0 0
  %246 = vmatpush1.bf16.msra.mxu0 0
  %247 = vmatprep.subr.bf16.mxu0 0
  %248 = vmatpush1.bf16.msra.mxu0 0
  %249 = vmatprep.subr.bf16.mxu0 0
  %250 = vmatpush1.bf16.msra.mxu0 0
  %251 = vmatprep.subr.bf16.mxu0 0
  %252 = vmatpush1.bf16.msra.mxu0 0
  %253 = vmatprep.subr.bf16.mxu0 0
  %254 = vmatpush1.bf16.msra.mxu0 0
  %255 = vmatprep.mubr.bf16.mxu0 0
  %256 = vmatmul.mubr.bf16.gmra.mrb[0].mxu0 %v218
  %v257 = vpop.f32.mrb[0].mxu0
  %v258 = vadd.f32 %v190, %v257
  %v259 = vpop.f32.mrb[0].mxu0
  %v260 = vpop.f32.mrb[0].mxu0
  %v261 = vadd.f32 %v190, %v260
  %v262 = vpop.f32.mrb[0].mxu0
  %263 = vmatprep.mubr.bf16.mxu0 0
  %264 = vmatmul.mubr.bf16.gmra.mrb[0].mxu0 %v221
  %v265 = vpop.f32.mrb[0].mxu0
  %v266 = vadd.f32 %v190, %v265
  %v267 = vpop.f32.mrb[0].mxu0
  %v268 = vpop.f32.mrb[0].mxu0
  %v269 = vpop.f32.mrb[0].mxu0
  %270 = vdwg.mxu0
  %vm271 = vcmask 64512
  %272 = vst.msk [vmem:[%s5] sm:$0xff] %vm271, %v258
  %273 = vst.msk [vmem:[%s5 + $0x8] sm:$0xff] %vm271, %v261
  %vm274 = vcmask 60416
  %275 = vst.msk [vmem:[%s5 + $0x10] sm:$0xf] %vm274, %v266
  // Predicated region
  $region22: #{tpu_custom_call.1} parent=0 // pred_check
    _
  $region23: #{tpu_custom_call.1} parent=0 // pred_check_branch
    %277 = sbr.rel (0) target = $region25
  $region24: #{tpu_custom_call.1} parent=0 // pred_region
    _
  $region25: #{tpu_custom_call.1} parent=0 // pred_fallthru
    _
  // Predicated region
  $region26: #{tpu_custom_call.1} parent=0 // pred_check
    _
  $region27: #{tpu_custom_call.1} parent=0 // pred_check_branch
    %279 = sbr.rel (0) target = $region29
  $region28: #{tpu_custom_call.1} parent=0 // pred_region
    _
  $region29: #{tpu_custom_call.1} parent=0 // pred_fallthru
    _

// kernel: tpu_custom_call.1
$region0: #{tpu_custom_call.1}
  #allocation0 [shape = 'u32[]', space=smem, size = 0x4, offset = 0x4, fixed_abs, tag = 'smem constant byte address 0x4 - core index']
  #allocation1 [shape = 'u32[144,128]{1,0:T(1,128)}', space=vmem, size = 0x12000, scoped, tag = 'internal scratch']
  %s0 = inlined_call_operand.vmem [shape: f32[20,128], index: 0, kind: input, shape index: {}]
  %s1 = inlined_call_operand.vmem [shape: bf16[128,64], index: 1, kind: input, shape index: {}]
  %s2 = inlined_call_operand.vmem [shape: f32[1,64], index: 2, kind: input, shape index: {}]
  %s3 = inlined_call_operand.vmem [shape: bf16[64,8], index: 3, kind: input, shape index: {}]
  %s4 = inlined_call_operand.vmem [shape: f32[1,8], index: 4, kind: input, shape index: {}]
  %s5 = inlined_call_operand.vmem [shape: f32[20,8], index: 5, kind: output, shape index: {}]
  %s6 = sld [smem:[#allocation0]]
  $region30: #{tpu_custom_call.1} parent=0
    _
  %s8 = ssub.s32 1, %s6
  %s9 = scalar_select 0, %s8, %s6
  // Predicated region
  $region2: #{tpu_custom_call.1} parent=0 // pred_check
    _
  $region3: #{tpu_custom_call.1} parent=0 // pred_check_branch
    %11 = sbr.rel (0) target = $region5
  $region4: #{tpu_custom_call.1} parent=0 // pred_region
    _
  $region5: #{tpu_custom_call.1} parent=0 // pred_fallthru
    _
  // Predicated region
  $region6: #{tpu_custom_call.1} parent=0 // pred_check
    _
  $region7: #{tpu_custom_call.1} parent=0 // pred_check_branch
    %13 = sbr.rel (0) target = $region9
  $region8: #{tpu_custom_call.1} parent=0 // pred_region
    _
  $region9: #{tpu_custom_call.1} parent=0 // pred_fallthru
    _
  // Predicated region
  $region10: #{tpu_custom_call.1} parent=0 // pred_check
    _
  $region11: #{tpu_custom_call.1} parent=0 // pred_check_branch
    %15 = sbr.rel (0) target = $region13
  $region12: #{tpu_custom_call.1} parent=0 // pred_region
    _
  $region13: #{tpu_custom_call.1} parent=0 // pred_fallthru
    _
  // Predicated region
  $region14: #{tpu_custom_call.1} parent=0 // pred_check
    _
  $region15: #{tpu_custom_call.1} parent=0 // pred_check_branch
    %17 = sbr.rel (0) target = $region17
  $region16: #{tpu_custom_call.1} parent=0 // pred_region
    _
  $region17: #{tpu_custom_call.1} parent=0 // pred_fallthru
    _
  // Predicated region
  $region18: #{tpu_custom_call.1} parent=0 // pred_check
    _
  $region19: #{tpu_custom_call.1} parent=0 // pred_check_branch
    %19 = sbr.rel (0) target = $region21
  $region20: #{tpu_custom_call.1} parent=0 // pred_region
    _
  $region21: #{tpu_custom_call.1} parent=0 // pred_fallthru
    _
  %v21 = vld [vmem:[%s0] sm:$0xff]
  %v22 = vld [vmem:[%s0 + $0x8] sm:$0xff]
  %v23 = vld [vmem:[%s0 + $0x10] sm:$0xf]
  %v24 = vld [vmem:[%s1] sm:$0xf]
  %v25 = vld [vmem:[%s1 + $0x4] sm:$0xf]
  %v26 = vld [vmem:[%s1 + $0x8] sm:$0xf]
  %v27 = vld [vmem:[%s1 + $0xc] sm:$0xf]
  %v28 = vld [vmem:[%s1 + $0x10] sm:$0xf]
  %v29 = vld [vmem:[%s1 + $0x14] sm:$0xf]
  %v30 = vld [vmem:[%s1 + $0x18] sm:$0xf]
  %v31 = vld [vmem:[%s1 + $0x1c] sm:$0xf]
  %v32 = vld [vmem:[%s1 + $0x20] sm:$0xf]
  %v33 = vld [vmem:[%s1 + $0x24] sm:$0xf]
  %v34 = vld [vmem:[%s1 + $0x28] sm:$0xf]
  %v35 = vld [vmem:[%s1 + $0x2c] sm:$0xf]
  %v36 = vld [vmem:[%s1 + $0x30] sm:$0xf]
  %v37 = vld [vmem:[%s1 + $0x34] sm:$0xf]
  %v38 = vld [vmem:[%s1 + $0x38] sm:$0xf]
  %v39 = vld [vmem:[%s1 + $0x3c] sm:$0xf]
  %v40 = vld [vmem:[%s2] sm:$0x1]
  %v41 = vsub.f32 0.0, %v21
  %v42 = vsub.f32 0.0, %v22
  %v43 = vsub.f32 0.0, %v23
  %v44 = vmul.f32 %v41, 1.442695
  %v45 = vpow.pop %v44
  %v46 = vmul.f32 %v42, 1.442695
  %v47 = vpow.pop %v46
  %v48 = vmul.f32 %v43, 1.442695
  %v49 = vpow.pop %v48
  %v50 = vadd.f32 %v45, 1.0
  %v51 = vadd.f32 %v47, 1.0
  %v52 = vadd.f32 %v49, 1.0
  %v53 = vrcp.pop %v50
  %v54 = vrcp.pop %v51
  %v55 = vrcp.pop %v52
  %v56 = vpack.c.bf16 %v54, %v53
  %v57 = vpack.c.bf16 %v55, %v55
  %v59 = vlaneseq
  %v60 = vshrl.u32 %v59, 7
  %v61 = vsub.s32 0, %v60
  %v62 = vrot.slane %v40, %v61
  %v80 = vunpack.c.l.b16 %v24
  %v81 = vunpack.c.l.b16 %v25
  %v82 = vunpack.c.l.b16 %v26
  %v83 = vunpack.c.l.b16 %v27
  %v84 = vunpack.c.l.b16 %v28
  %v85 = vunpack.c.l.b16 %v29
  %v86 = vunpack.c.l.b16 %v30
  %v87 = vunpack.c.l.b16 %v31
  %v88 = vunpack.c.l.b16 %v32
  %v89 = vunpack.c.l.b16 %v33
  %v90 = vunpack.c.l.b16 %v34
  %v91 = vunpack.c.l.b16 %v35
  %v92 = vunpack.c.l.b16 %v36
  %v93 = vunpack.c.l.b16 %v37
  %v94 = vunpack.c.l.b16 %v38
  %v95 = vunpack.c.l.b16 %v39
  %v96 = vpack.c.b16 %v81, %v80
  %v97 = vpack.c.b16 %v83, %v82
  %v98 = vpack.c.b16 %v85, %v84
  %v99 = vpack.c.b16 %v87, %v86
  %v100 = vpack.c.b16 %v89, %v88
  %v101 = vpack.c.b16 %v91, %v90
  %v102 = vpack.c.b16 %v93, %v92
  %v103 = vpack.c.b16 %v95, %v94
  %112 = vmatprep.subr.bf16.mxu0 0
  %113 = vmatpush1.bf16.msra.mxu0 %v96
  %114 = vmatprep.subr.bf16.mxu0 0
  %115 = vmatpush1.bf16.msra.mxu0 %v97
  %116 = vmatprep.subr.bf16.mxu0 0
  %117 = vmatpush1.bf16.msra.mxu0 %v98
  %118 = vmatprep.subr.bf16.mxu0 0
  %119 = vmatpush1.bf16.msra.mxu0 %v99
  %120 = vmatprep.subr.bf16.mxu0 0
  %121 = vmatpush1.bf16.msra.mxu0 %v100
  %122 = vmatprep.subr.bf16.mxu0 0
  %123 = vmatpush1.bf16.msra.mxu0 %v101
  %124 = vmatprep.subr.bf16.mxu0 0
  %125 = vmatpush1.bf16.msra.mxu0 %v102
  %126 = vmatprep.subr.bf16.mxu0 0
  %127 = vmatpush1.bf16.msra.mxu0 %v103
  %128 = vmatprep.subr.bf16.mxu0 0
  %129 = vmatpush1.bf16.msra.mxu0 0
  %130 = vmatprep.subr.bf16.mxu0 0
  %131 = vmatpush1.bf16.msra.mxu0 0
  %132 = vmatprep.subr.bf16.mxu0 0
  %133 = vmatpush1.bf16.msra.mxu0 0
  %134 = vmatprep.subr.bf16.mxu0 0
  %135 = vmatpush1.bf16.msra.mxu0 0
  %136 = vmatprep.subr.bf16.mxu0 0
  %137 = vmatpush1.bf16.msra.mxu0 0
  %138 = vmatprep.subr.bf16.mxu0 0
  %139 = vmatpush1.bf16.msra.mxu0 0
  %140 = vmatprep.subr.bf16.mxu0 0
  %141 = vmatpush1.bf16.msra.mxu0 0
  %142 = vmatprep.subr.bf16.mxu0 0
  %143 = vmatpush1.bf16.msra.mxu0 0
  %144 = vmatprep.mubr.bf16.mxu0 0
  %145 = vmatmul.mubr.bf16.gmra.mrb[0].mxu0 %v56
  %v146 = vpop.f32.mrb[0].mxu0
  %v147 = vadd.f32 %v62, %v146
  %v148 = vpop.f32.mrb[0].mxu0
  %v149 = vpop.f32.mrb[0].mxu0
  %v150 = vadd.f32 %v62, %v149
  %v151 = vpop.f32.mrb[0].mxu0
  %152 = vmatprep.mubr.bf16.mxu0 0
  %153 = vmatmul.mubr.bf16.gmra.mrb[0].mxu0 %v57
  %v154 = vpop.f32.mrb[0].mxu0
  %v155 = vadd.f32 %v62, %v154
  %v156 = vpop.f32.mrb[0].mxu0
  %v157 = vpop.f32.mrb[0].mxu0
  %v158 = vpop.f32.mrb[0].mxu0
  %159 = vdwg.mxu0
  %v160 = vld [vmem:[%s3] sm:$0xf]
  %v161 = vld [vmem:[%s3 + $0x4] sm:$0xf]
  %v162 = vld [vmem:[%s3 + $0x8] sm:$0xf]
  %v163 = vld [vmem:[%s3 + $0xc] sm:$0xf]
  %v164 = vld [vmem:[%s3 + $0x10] sm:$0xf]
  %v165 = vld [vmem:[%s3 + $0x14] sm:$0xf]
  %v166 = vld [vmem:[%s3 + $0x18] sm:$0xf]
  %v167 = vld [vmem:[%s3 + $0x1c] sm:$0xf]
  %v168 = vld [vmem:[%s4] sm:$0x1]
  %v169 = vsub.f32 0.0, %v147
  %v170 = vsub.f32 0.0, %v150
  %v171 = vsub.f32 0.0, %v155
  %v172 = vmul.f32 %v169, 1.442695
  %v173 = vpow.pop %v172
  %v174 = vmul.f32 %v170, 1.442695
  %v175 = vpow.pop %v174
  %v176 = vmul.f32 %v171, 1.442695
  %v177 = vpow.pop %v176
  %v178 = vadd.f32 %v173, 1.0
  %v179 = vadd.f32 %v175, 1.0
  %v180 = vadd.f32 %v177, 1.0
  %v181 = vrcp.pop %v178
  %v182 = vrcp.pop %v179
  %v183 = vrcp.pop %v180
  %v184 = vpack.c.bf16 %v182, %v181
  %v185 = vpack.c.bf16 %v183, %v183
  %v187 = vlaneseq
  %v188 = vshrl.u32 %v187, 7
  %v189 = vsub.s32 0, %v188
  %v190 = vrot.slane %v168, %v189
  %v200 = vunpack.c.l.b16 %v160
  %v201 = vunpack.c.l.b16 %v161
  %v202 = vunpack.c.l.b16 %v162
  %v203 = vunpack.c.l.b16 %v163
  %v204 = vunpack.c.l.b16 %v164
  %v205 = vunpack.c.l.b16 %v165
  %v206 = vunpack.c.l.b16 %v166
  %v207 = vunpack.c.l.b16 %v167
  %v208 = vpack.c.b16 %v201, %v200
  %v209 = vpack.c.b16 %v203, %v202
  %v210 = vpack.c.b16 %v205, %v204
  %v211 = vpack.c.b16 %v207, %v206
  %vm216 = vcmask 523264
  %v218 = vsel %vm216, %v184, 0
  %v221 = vsel %vm216, %v185, 0
  %223 = vmatprep.subr.bf16.mxu0 0
  %224 = vmatpush1.bf16.msra.mxu0 %v208
  %225 = vmatprep.subr.bf16.mxu0 0
  %226 = vmatpush1.bf16.msra.mxu0 %v209
  %227 = vmatprep.subr.bf16.mxu0 0
  %228 = vmatpush1.bf16.msra.mxu0 %v210
  %229 = vmatprep.subr.bf16.mxu0 0
  %230 = vmatpush1.bf16.msra.mxu0 %v211
  %231 = vmatprep.subr.bf16.mxu0 0
  %232 = vmatpush1.bf16.msra.mxu0 0
  %233 = vmatprep.subr.bf16.mxu0 0
  %234 = vmatpush1.bf16.msra.mxu0 0
  %235 = vmatprep.subr.bf16.mxu0 0
  %236 = vmatpush1.bf16.msra.mxu0 0
  %237 = vmatprep.subr.bf16.mxu0 0
  %238 = vmatpush1.bf16.msra.mxu0 0
  %239 = vmatprep.subr.bf16.mxu0 0
  %240 = vmatpush1.bf16.msra.mxu0 0
  %241 = vmatprep.subr.bf16.mxu0 0
  %242 = vmatpush1.bf16.msra.mxu0 0
  %243 = vmatprep.subr.bf16.mxu0 0
  %244 = vmatpush1.bf16.msra.mxu0 0
  %245 = vmatprep.subr.bf16.mxu0 0
  %246 = vmatpush1.bf16.msra.mxu0 0
  %247 = vmatprep.subr.bf16.mxu0 0
  %248 = vmatpush1.bf16.msra.mxu0 0
  %249 = vmatprep.subr.bf16.mxu0 0
  %250 = vmatpush1.bf16.msra.mxu0 0
  %251 = vmatprep.subr.bf16.mxu0 0
  %252 = vmatpush1.bf16.msra.mxu0 0
  %253 = vmatprep.subr.bf16.mxu0 0
  %254 = vmatpush1.bf16.msra.mxu0 0
  %255 = vmatprep.mubr.bf16.mxu0 0
  %256 = vmatmul.mubr.bf16.gmra.mrb[0].mxu0 %v218
  %v257 = vpop.f32.mrb[0].mxu0
  %v258 = vadd.f32 %v190, %v257
  %v259 = vpop.f32.mrb[0].mxu0
  %v260 = vpop.f32.mrb[0].mxu0
  %v261 = vadd.f32 %v190, %v260
  %v262 = vpop.f32.mrb[0].mxu0
  %263 = vmatprep.mubr.bf16.mxu0 0
  %264 = vmatmul.mubr.bf16.gmra.mrb[0].mxu0 %v221
  %v265 = vpop.f32.mrb[0].mxu0
  %v266 = vadd.f32 %v190, %v265
  %v267 = vpop.f32.mrb[0].mxu0
  %v268 = vpop.f32.mrb[0].mxu0
  %v269 = vpop.f32.mrb[0].mxu0
  %270 = vdwg.mxu0
  %vm271 = vcmask 64512
  %272 = vst.msk [vmem:[%s5] sm:$0xff] %vm271, %v258
  %273 = vst.msk [vmem:[%s5 + $0x8] sm:$0xff] %vm271, %v261
  %vm274 = vcmask 60416
  %275 = vst.msk [vmem:[%s5 + $0x10] sm:$0xf] %vm274, %v266
  // Predicated region
  $region22: #{tpu_custom_call.1} parent=0 // pred_check
    _
  $region23: #{tpu_custom_call.1} parent=0 // pred_check_branch
    %277 = sbr.rel (0) target = $region25
  $region24: #{tpu_custom_call.1} parent=0 // pred_region
    _
  $region25: #{tpu_custom_call.1} parent=0 // pred_fallthru
    _
  // Predicated region
  $region26: #{tpu_custom_call.1} parent=0 // pred_check
    _
  $region27: #{tpu_custom_call.1} parent=0 // pred_check_branch
    %279 = sbr.rel (0) target = $region29
  $region28: #{tpu_custom_call.1} parent=0 // pred_region
    _
  $region29: #{tpu_custom_call.1} parent=0 // pred_fallthru
    _

</llo_original>
